<compile_context>
chip_gen: v7x
topology: tpu7x:2x2x1
jax: 0.10.0
libtpu: 0.0.40
codegen_flags: <defaults>
</compile_context>

<pallas_src>
import jax
import jax.numpy as jnp
from jax.experimental import pallas as pl
from jax.experimental.pallas import tpu as pltpu


def _identity_copy_kernel(x_ref, o_ref):
    # TODO(synk): BaseDecoder.forward is abstract (raises NotImplementedError)
    # in PyTorch; concrete subclasses add their decode compute here.  The
    # base-class contract reduces to an identity pass-through of the block.
    o_ref[...] = x_ref[...]


_LANE = 128
_SUBLANE = 8
# Per-buffer tile budget.  2 buffers (in + out) x double buffering x 2 MiB
# = 8 MiB, comfortably under v5e's 16 MiB / v6e-v7x's 32 MiB scoped defaults.
_TARGET_TILE_BYTES = 2 * 1024 * 1024
# Cap the lane width so a single tile row stays a reasonable fraction of the
# budget (8192 lanes * 4 B = 32 KiB per row).
_MAX_LANES = 8192


def _pick_lanes(total: int):
    """Largest lane-dense trailing dim (multiple of 128, <= _MAX_LANES)
    dividing `total`, or None if no such factor exists."""
    best = None
    lanes = _LANE
    while lanes <= _MAX_LANES:
        if total % lanes == 0:
            best = lanes
        lanes += _LANE
    return best


def _pick_tile_rows(rows: int, lanes: int, itemsize: int) -> int:
    """Biggest per-block row count that fits the VMEM budget, divides `rows`,
    and respects the sublane (8) divisibility rule (or equals `rows`)."""
    budget_rows = max(1, _TARGET_TILE_BYTES // (lanes * itemsize))
    if rows <= budget_rows:
        return rows  # single block covers everything (block == full dim)
    cand = (budget_rows // _SUBLANE) * _SUBLANE
    while cand >= _SUBLANE:
        if rows % cand == 0:
            return cand
        cand -= _SUBLANE
    # TODO(synk): no clean multiple-of-8 divisor (e.g. prime row count); fall
    # back to one full block.  Fine for realistic decoder activation sizes.
    return rows


def _passthrough_copy(x: jax.Array) -> jax.Array:
    """Identity pass-through as a lane-dense, VMEM-budgeted Pallas copy."""
    total = x.size
    if total == 0:
        return x

    lanes = _pick_lanes(total)
    if lanes is None:
        # Not factorizable into a 128-multiple trailing dim: copy as a single
        # whole-array 2-D block (block dims equal full dims, so the (8,128)
        # divisibility constraint does not apply).
        rows, lanes = 1, total
    else:
        rows = total // lanes

    tile_rows = _pick_tile_rows(rows, lanes, jnp.dtype(x.dtype).itemsize)
    grid = (rows // tile_rows,)

    x2d = x.reshape(rows, lanes)
    out2d = pl.pallas_call(
        _identity_copy_kernel,
        out_shape=jax.ShapeDtypeStruct((rows, lanes), x.dtype),
        grid=grid,
        in_specs=[pl.BlockSpec((tile_rows, lanes), lambda i: (i, 0))],
        out_specs=pl.BlockSpec((tile_rows, lanes), lambda i: (i, 0)),
        compiler_params=pltpu.CompilerParams(
            dimension_semantics=("parallel",),
        ),
    )(x2d)
    return out2d.reshape(x.shape)


class BaseDecoderPallas:
    """JAX/Pallas mirror of vae.base.BaseDecoder.

    __init__ stores the config (no parameters are created, matching the
    PyTorch module).  forward() is the base-class pass-through: either a
    zero-cost return of the input (`identity_fast_path=True`, the cheapest
    correct implementation) or a lane-dense Pallas copy kernel that serves as
    the subclass kernel skeleton.
    """

    def __init__(self, config: dict):
        self.config = config
        self.device = config["device"]
        self.identity_fast_path = config.get("identity_fast_path", False)

    def forward(self, x: jax.Array) -> jax.Array:
        # TODO(synk): abstract in PyTorch (raises NotImplementedError);
        # base-class contract is a parameter-free pass-through.
        if self.identity_fast_path:
            return x  # no kernel launch, no HBM traffic — preferred base path
        return _passthrough_copy(x)

    def __call__(self, x):
        return self.forward(x)


if __name__ == "__main__":
    key = jax.random.PRNGKey(0)
    # Small NCHW input consistent with a VAE decoder latent/input block.
    x = jax.random.normal(key, (2, 4, 16, 16), dtype=jnp.float32)

    decoder = BaseDecoderPallas(config={"device": "tpu"})
    out = jax.block_until_ready(decoder(x))
    assert out.shape == x.shape and out.dtype == x.dtype
    assert bool(jnp.array_equal(out, x)), "pass-through mismatch"

    # Exercise the non-128-divisible fallback (single whole-array block).
    x_odd = jax.random.normal(jax.random.PRNGKey(0), (2, 3, 5, 7), jnp.float32)
    out_odd = jax.block_until_ready(decoder(x_odd))
    assert bool(jnp.array_equal(out_odd, x_odd)), "fallback pass-through mismatch"

    # Exercise a larger, multi-grid-step shape (tile-rows path).
    x_big = jax.random.normal(jax.random.PRNGKey(0), (8, 16, 64, 64), jnp.float32)
    out_big = jax.block_until_ready(decoder(x_big))
    assert bool(jnp.array_equal(out_big, x_big)), "tiled pass-through mismatch"

    # Exercise the zero-cost fast path (no kernel launch).
    fast = BaseDecoderPallas(config={"device": "tpu", "identity_fast_path": True})
    out_fast = jax.block_until_ready(fast(x))
    assert bool(jnp.array_equal(out_fast, x))

    print("KERNEL_OK")
</pallas_src>

<mosaic_0001>
module attributes {stable_mosaic.version = 11 : i64} {
  func.func @_identity_copy_kernel(%arg0: i32, %arg1: memref<1x2048xf32, #tpu.memory_space<vmem>>, %arg2: memref<1x2048xf32, #tpu.memory_space<vmem>>) attributes {dimension_semantics = [#tpu.dimension_semantics<parallel>], iteration_bounds = array<i64: 1>, scalar_prefetch = 0 : i64, scratch_operands = 0 : i64, tpu.core_type = #tpu.core_type<tc>, window_params = [{transform_indices = @transform_0, window_bounds = array<i64: 1, 2048>}, {transform_indices = @transform_1, window_bounds = array<i64: 1, 2048>}]} {
    %c0 = arith.constant 0 : index
    %c0_0 = arith.constant 0 : index
    %0 = vector.load %arg1[%c0, %c0_0] : memref<1x2048xf32, #tpu.memory_space<vmem>>, vector<1x2048xf32>
    %c0_1 = arith.constant 0 : index
    %c0_2 = arith.constant 0 : index
    %1 = vector.load %arg2[%c0_1, %c0_2] : memref<1x2048xf32, #tpu.memory_space<vmem>>, vector<1x2048xf32>
    tpu.vector_store %arg2[%c0_1, %c0_2], %0 {strides = array<i32>} : memref<1x2048xf32, #tpu.memory_space<vmem>>, vector<1x2048xf32>,
    return
  }
  func.func @transform_0(%arg0: i32) -> (i32, i32) {
    %c0_i32 = arith.constant 0 : i32
    %c0_i32_0 = arith.constant 0 : i32
    return %arg0, %c0_i32 : i32, i32
  }
  func.func @transform_1(%arg0: i32) -> (i32, i32) {
    %c0_i32 = arith.constant 0 : i32
    %c0_i32_0 = arith.constant 0 : i32
    return %arg0, %c0_i32 : i32, i32
  }
}

</mosaic_0001>

<llo_original>
// kernel: tpu_custom_call.1
$region0: #{tpu_custom_call.1}
  #allocation0 [shape = 'u32[]', space=smem, size = 0x4, offset = 0x4, fixed_abs, tag = 'smem constant byte address 0x4 - core index']
  #allocation1 [shape = 'u32[144,128]{1,0:T(1,128)}', space=vmem, size = 0x12000, scoped, tag = 'internal scratch']
  %s0 = inlined_call_operand.hbm [shape: f32[1,2048], index: 0, kind: input, shape index: {}]
  %s1 = inlined_call_operand.hbm [shape: f32[1,2048], index: 1, kind: output, shape index: {}]
  %s2 = sld [smem:[#allocation0]]
  $region18: #{tpu_custom_call.1} parent=0
    _
  %s4 = ssub.s32 1, %s2
  %s5 = scalar_select 0, %s4, %s2
  $region1: #{tpu_custom_call.1} parent=0
    #allocation2 [shape = 'u8[8192]{0}', space=vmem, size = 0x2000, scoped, tag = 'input window, operand 0, single buffered']
    #allocation3 [shape = 's32[1]{0}', space=sflag, size = 0x4, scoped, tag = 'scoped memory for tpu_custom_call.1']
    #allocation4 [shape = 's32[1]{0}', space=sflag, size = 0x4, scoped, tag = 'scoped memory for tpu_custom_call.1']
    #allocation5 [shape = 'u8[8192]{0}', space=vmem, size = 0x2000, scoped, tag = 'output window, operand 0, single buffered']
    %6 = vsyncpa [#allocation3], 0
    %7 = vsyncpa [#allocation4], 0
    // Predicated region
    $region2: #{tpu_custom_call.1} parent=1 // pred_check
      _
    $region3: #{tpu_custom_call.1} parent=1 // pred_check_branch
      %9 = sbr.rel (0) target = $region5
    $region4: #{tpu_custom_call.1} parent=1 // pred_region
      %s11 = ssub.s32 256, 256
      %12 = vsyncadd [#allocation3], %s11
      %s14 = sshll.u32 [#allocation2], 4
      %s15 = int_to_ptr.vmem [resolvable:$true] %s14
      %17 = dma.hbm_to_vmem [thread:$0]  %s0, 256, %s15, [#allocation3]
    $region5: #{tpu_custom_call.1} parent=1 // pred_fallthru
      _
    // Predicated region
    $region6: #{tpu_custom_call.1} parent=1 // pred_check
      _
    $region7: #{tpu_custom_call.1} parent=1 // pred_check_branch
      %19 = sbr.rel (0) target = $region9
    $region8: #{tpu_custom_call.1} parent=1 // pred_region
      %20 = dma.done [#allocation3], 256
    $region9: #{tpu_custom_call.1} parent=1 // pred_fallthru
      _
    %v21 = vld [vmem:[#allocation2] sm:$0xff]
    %v22 = vld [vmem:[#allocation2 + $0x8] sm:$0xff]
    %23 = vst [vmem:[#allocation5] sm:$0xff] %v21
    %24 = vst [vmem:[#allocation5 + $0x8] sm:$0xff] %v22
    // Predicated region
    $region10: #{tpu_custom_call.1} parent=1 // pred_check
      _
    $region11: #{tpu_custom_call.1} parent=1 // pred_check_branch
      %26 = sbr.rel (0) target = $region13
    $region12: #{tpu_custom_call.1} parent=1 // pred_region
      %s28 = ssub.s32 256, 256
      %29 = vsyncadd [#allocation4], %s28
      %s31 = sshll.u32 [#allocation5], 4
      %s32 = int_to_ptr.vmem [resolvable:$true] %s31
      %34 = dma.vmem_to_hbm [thread:$0]  %s32, 256, %s1, [#allocation4]
    $region13: #{tpu_custom_call.1} parent=1 // pred_fallthru
      _
    // Predicated region
    $region14: #{tpu_custom_call.1} parent=1 // pred_check
      _
    $region15: #{tpu_custom_call.1} parent=1 // pred_check_branch
      %36 = sbr.rel (0) target = $region17
    $region16: #{tpu_custom_call.1} parent=1 // pred_region
      %37 = dma.done [#allocation4], 256
    $region17: #{tpu_custom_call.1} parent=1 // pred_fallthru
      _
    %38 = vsyncpa [#allocation3], 1
    %39 = vsyncpa [#allocation4], 1

</llo_original>
